<compile_context>
chip_gen: v5e
topology: v5e:2x2
jax: 0.10.0
libtpu: 0.0.40
codegen_flags: <defaults>
</compile_context>

<pallas_src>
import functools

import jax
import jax.numpy as jnp
from jax.experimental import pallas as pl
from jax.experimental.pallas import tpu as pltpu

NEG_INF = -1e30          # finite, bf16-representable sentinel for masked logits
TILE_I = 128             # target-node tile
TILE_J = 128             # source-node tile (lane-dense softmax axis)
LOGIT_CHUNK = 128        # feature chunk for the attention-logit contraction


# ----------------------------------------------------------------------------
# Pallas kernels
# ----------------------------------------------------------------------------
def _proj_kernel(x_ref, w_ref, b_ref, xl_ref, xr_ref):
    """xl = x @ Wl + bl ; xr = x @ Wr + br, with Wl|Wr fused into one matmul."""
    y = jnp.dot(x_ref[...], w_ref[...], preferred_element_type=jnp.float32)
    y = y + b_ref[...]
    c = y.shape[1] // 2
    xl_ref[...] = y[:, :c].astype(xl_ref.dtype)
    xr_ref[...] = y[:, c:].astype(xr_ref.dtype)


def _gatv2_attn_kernel(occ_ref, xr_ref, xl_ref, att_ref, we_ref, bias_ref,
                       ea_ref, mb_ref, o_ref, m_sc, l_sc, acc_sc, *, apply_elu):
    """One (i, j) tile: GATv2 logits + online-softmax update + weighted aggregation.

    occ_ref (SMEM, scalar prefetch) holds a per-tile edge-occupancy flag; empty
    tiles skip all compute (the online-softmax state simply carries through).
    """
    i = pl.program_id(0)
    j = pl.program_id(1)
    nj = pl.num_programs(1)

    @pl.when(j == 0)
    def _():
        m_sc[...] = jnp.full(m_sc.shape, NEG_INF, dtype=m_sc.dtype)
        l_sc[...] = jnp.zeros(l_sc.shape, dtype=l_sc.dtype)
        acc_sc[...] = jnp.zeros(acc_sc.shape, dtype=acc_sc.dtype)

    @pl.when(occ_ref[i * nj + j] > 0)          # skip fully-masked (i, j) tiles
    def _():
        xr = xr_ref[...]                       # (TI, C)     bf16   target projections
        xl = xl_ref[...]                       # (TJ, C)     bf16   source projections
        ea = ea_ref[...]                       # (TI*TJ, De) bf16   edge attrs, row = ii*TJ + jj
        att = att_ref[...]                     # (1, C)      bf16
        we = we_ref[...]                       # (De, C)     bf16
        ti, c = xr.shape
        tj = xl.shape[0]

        # Attention logits, accumulated over feature chunks to bound VMEM temporaries:
        #   logit[ii, jj] = sum_c att[c] * LeakyReLU(xl[jj, c] + xr[ii, c] + (ea @ We)[ii, jj, c])
        logits = jnp.zeros((ti, tj), jnp.float32)
        for c0 in range(0, c, LOGIT_CHUNK):
            c1 = c0 + LOGIT_CHUNK
            ep = jnp.dot(ea, we[:, c0:c1])                        # (TI*TJ, chunk) bf16
            h = xr[:, None, c0:c1] + xl[None, :, c0:c1] + ep.reshape(ti, tj, c1 - c0)
            h = jnp.where(h > 0, h, 0.2 * h)                      # LeakyReLU(0.2)
            h = h * att[:, c0:c1][None, :, :]
            logits = logits + jnp.sum(h.astype(jnp.float32), axis=-1)

        logits = logits + mb_ref[...].astype(jnp.float32)         # additive edge mask (0 / -1e30)

        # --- online softmax update (flash-attention style, f32 stats) ---
        m_prev = m_sc[...]
        m_new = jnp.maximum(m_prev, jnp.max(logits, axis=-1, keepdims=True))
        corr = jnp.exp(m_prev - m_new)
        p = jnp.exp(logits - m_new)                               # masked entries underflow to 0
        l_sc[...] = corr * l_sc[...] + jnp.sum(p, axis=-1, keepdims=True)
        acc_sc[...] = corr * acc_sc[...] + jnp.dot(
            p.astype(xl.dtype), xl, preferred_element_type=jnp.float32)
        m_sc[...] = m_new

    @pl.when(j == nj - 1)
    def _():
        # deferred normalization: one EUP reciprocal per row instead of N^2 divides
        out = acc_sc[...] * pl.reciprocal(l_sc[...], approx=True)
        out = out + bias_ref[...].astype(jnp.float32)
        if apply_elu:
            out = jnp.where(out > 0, out, jnp.exp(out) - 1.0)     # F.elu
        o_ref[...] = out.astype(o_ref.dtype)


def _mean_pool_kernel(seg_ref, x_ref, o_ref):
    # seg[g, n] = 1/|graph g| for nodes of graph g, else 0  ->  per-graph mean
    o_ref[...] = jnp.dot(seg_ref[...], x_ref[...], preferred_element_type=jnp.float32)


# ----------------------------------------------------------------------------
# Wrappers
# ----------------------------------------------------------------------------
def gatv2_layer(x_bf16, p, ea_tiles, mbias, tile_occ, *, apply_elu):
    n, fin = x_bf16.shape
    de, c = p["we"].shape
    ti, tj = TILE_I, TILE_J
    assert n % ti == 0 and n % tj == 0 and c % LOGIT_CHUNK == 0
    ni, nj = n // ti, n // tj

    # 1) node projections, hoisted out of the attention tiling (fused Wl|Wr).
    xl, xr = pl.pallas_call(
        _proj_kernel,
        out_shape=(jax.ShapeDtypeStruct((n, c), jnp.bfloat16),
                   jax.ShapeDtypeStruct((n, c), jnp.bfloat16)),
        grid_spec=pltpu.PrefetchScalarGridSpec(
            num_scalar_prefetch=0, grid=(ni,),
            in_specs=[pl.BlockSpec((ti, fin), lambda i: (i, 0)),
                      pl.BlockSpec((fin, 2 * c), lambda i: (0, 0)),
                      pl.BlockSpec((1, 2 * c), lambda i: (0, 0))],
            out_specs=[pl.BlockSpec((ti, c), lambda i: (i, 0)),
                       pl.BlockSpec((ti, c), lambda i: (i, 0))]),
        compiler_params=pltpu.CompilerParams(dimension_semantics=("parallel",)),
    )(x_bf16, p["wlr"], p["blr"])

    # 2) tiled attention + aggregation (flash-style online softmax over source tiles),
    #    with a scalar-prefetched per-tile occupancy flag to skip empty tiles.
    kernel = functools.partial(_gatv2_attn_kernel, apply_elu=apply_elu)
    return pl.pallas_call(
        kernel,
        out_shape=jax.ShapeDtypeStruct((n, c), jnp.float32),
        grid_spec=pltpu.PrefetchScalarGridSpec(
            num_scalar_prefetch=1, grid=(ni, nj),
            in_specs=[
                pl.BlockSpec((ti, c), lambda i, j, occ: (i, 0)),                  # xr (targets)
                pl.BlockSpec((tj, c), lambda i, j, occ: (j, 0)),                  # xl (sources)
                pl.BlockSpec((1, c), lambda i, j, occ: (0, 0)),                   # att
                pl.BlockSpec((de, c), lambda i, j, occ: (0, 0)),                  # We
                pl.BlockSpec((1, c), lambda i, j, occ: (0, 0)),                   # bias
                pl.BlockSpec((ti * tj, de), lambda i, j, occ: (i * nj + j, 0)),   # edge attr tile
                pl.BlockSpec((ti, tj), lambda i, j, occ: (i, j)),                 # mask bias
            ],
            out_specs=pl.BlockSpec((ti, c), lambda i, j, occ: (i, 0)),
            scratch_shapes=[pltpu.VMEM((ti, 1), jnp.float32),     # m
                            pltpu.VMEM((ti, 1), jnp.float32),     # l
                            pltpu.VMEM((ti, c), jnp.float32)]),   # acc
        compiler_params=pltpu.CompilerParams(
            dimension_semantics=("parallel", "arbitrary"),
            vmem_limit_bytes=48 * 1024 * 1024),
    )(tile_occ, xr, xl, p["att"], p["we"], p["bias"], ea_tiles, mbias)


def mean_pool(seg, x):
    vmem = pl.BlockSpec(memory_space=pltpu.MemorySpace.VMEM)
    return pl.pallas_call(
        _mean_pool_kernel,
        out_shape=jax.ShapeDtypeStruct((seg.shape[0], x.shape[1]), jnp.float32),
        in_specs=[vmem, vmem],
        out_specs=vmem,
    )(seg, x)


# ----------------------------------------------------------------------------
# Glue: densified graph (with padding), self loops, mask bias, occupancy, segments
# ----------------------------------------------------------------------------
def build_dense_edges(edge_index, edge_attr_emb, n_pad, ti, tj):
    src, dst = edge_index[0], edge_index[1]
    de = edge_attr_emb.shape[-1]
    # PyG GATv2Conv removes existing self loops, then re-adds them.
    w = (src != dst).astype(jnp.float32)

    adj = jnp.zeros((n_pad, n_pad), jnp.float32).at[dst, src].add(w)
    adj = jnp.minimum(adj, 1.0)
    ea = jnp.zeros((n_pad, n_pad, de), jnp.float32).at[dst, src].add(
        edge_attr_emb * w[:, None])

    # self-loop attr = mean of incoming edge attrs per target (fill_value='mean')
    deg = jnp.sum(adj, axis=1)
    loop_attr = jnp.sum(ea, axis=1) / jnp.maximum(deg, 1.0)[:, None]
    idx = jnp.arange(n_pad)
    adj = adj.at[idx, idx].set(1.0)        # self loops (also on padding rows -> finite rows)
    ea = ea.at[idx, idx].set(loop_attr)

    # additive mask bias, bf16 storage (halves mask DMA vs f32 {0,1} mask)
    mbias = jnp.where(adj > 0, 0.0, NEG_INF).astype(jnp.bfloat16)

    # edge attrs pre-tiled and flattened: one lane-dense (TI*TJ, De) matmul operand
    # per (i-tile, j-tile), so the kernel does no relayout before the MXU.
    ni, nj = n_pad // ti, n_pad // tj
    ea_tiles = (ea.reshape(ni, ti, nj, tj, de)
                  .transpose(0, 2, 1, 3, 4)
                  .reshape(ni * nj * ti * tj, de)
                  .astype(jnp.bfloat16))

    # per-(i, j) tile occupancy flag (row-major over the grid) for the compute skip
    tile_occ = (adj.reshape(ni, ti, nj, tj).sum(axis=(1, 3)) > 0
                ).astype(jnp.int32).reshape(-1)
    return mbias, ea_tiles, tile_occ


def build_segmat(ptr, n_pad):
    g = len(ptr) - 1
    seg = jnp.zeros((g, n_pad), jnp.float32)
    for i in range(g):
        cnt = ptr[i + 1] - ptr[i]
        seg = seg.at[i, ptr[i]:ptr[i + 1]].set(1.0 / cnt)
    return seg


# ----------------------------------------------------------------------------
# Parameter init (deterministic; shapes from the PyTorch __init__)
# ----------------------------------------------------------------------------
def _glorot(key, shape):
    lim = jnp.sqrt(6.0 / (shape[0] + shape[1]))
    return jax.random.uniform(key, shape, jnp.float32, -lim, lim)


def init_gatv2(key, fin, fout, edge_dim):
    k = jax.random.split(key, 4)
    wl = _glorot(k[0], (fin, fout))
    wr = _glorot(k[1], (fin, fout))
    return dict(
        wlr=jnp.concatenate([wl, wr], axis=1).astype(jnp.bfloat16),   # fused (Fin, 2C)
        blr=jnp.zeros((1, 2 * fout), jnp.float32),
        we=_glorot(k[2], (edge_dim, fout)).astype(jnp.bfloat16),
        att=_glorot(k[3], (1, fout)).astype(jnp.bfloat16),
        bias=jnp.zeros((1, fout), jnp.float32),
    )


def init_params(key):
    ke, k1, k2, k3, kp = jax.random.split(key, 5)
    params = dict(
        emb=jax.random.normal(ke, (128, 64), jnp.float32),            # nn.Embedding(128, 64)
        conv1=init_gatv2(k1, 64, 128, 64),
        conv2=init_gatv2(k2, 128, 128, 64),
        conv3=init_gatv2(k3, 128, 256, 64),
    )
    # predict head parameters exist in __init__ but are NOT used in forward()
    kps = jax.random.split(kp, 4)
    params["predict"] = [
        (_glorot(kps[0], (256, 256)), jnp.zeros((256,), jnp.float32)),
        (_glorot(kps[1], (256, 128)), jnp.zeros((128,), jnp.float32)),
        (_glorot(kps[2], (128, 64)), jnp.zeros((64,), jnp.float32)),
        (_glorot(kps[3], (64, 1)), jnp.zeros((1,), jnp.float32)),
    ]
    return params


# ----------------------------------------------------------------------------
# Forward pass (mirrors GAT.forward)
# ----------------------------------------------------------------------------
def gat_forward(params, x_idx, edge_index, edge_attr_idx, ptr):
    emb = params["emb"]
    n_real = x_idx.shape[0]
    n_pad = ((n_real + TILE_I - 1) // TILE_I) * TILE_I      # lane-dense node count

    x = jnp.pad(jnp.take(emb, x_idx, axis=0), ((0, n_pad - n_real), (0, 0)))   # (Npad, 64)
    eattr = jnp.take(emb, edge_attr_idx, axis=0)                                # (E, 64)

    # TODO(synk): fuse the three GATv2 layers (or add a layer grid axis) so the dense
    # edge-attr stream is read from HBM once instead of three times, and project edge
    # attrs in edge-list space for sparse graphs (E << N^2).
    mbias, ea_tiles, tile_occ = build_dense_edges(edge_index, eattr, n_pad, TILE_I, TILE_J)

    h = gatv2_layer(x.astype(jnp.bfloat16), params["conv1"], ea_tiles, mbias, tile_occ,
                    apply_elu=True)                                  # conv1 + F.elu
    h = gatv2_layer(h.astype(jnp.bfloat16), params["conv2"], ea_tiles, mbias, tile_occ,
                    apply_elu=True)                                  # conv2 + F.elu
    h = gatv2_layer(h.astype(jnp.bfloat16), params["conv3"], ea_tiles, mbias, tile_occ,
                    apply_elu=False)                                 # conv3

    seg = build_segmat(ptr, n_pad)                                   # per-graph mean via ptr
    return mean_pool(seg, h)                                         # (num_graphs, 256)


# ----------------------------------------------------------------------------
if __name__ == "__main__":
    key = jax.random.PRNGKey(0)
    kx, kparams = jax.random.split(key)

    # Two graphs of 8 nodes each (ptr = [0, 8, 16]); bidirectional ring edges.
    n_nodes, ptr = 16, [0, 8, 16]
    src, dst = [], []
    for g in range(2):
        o = 8 * g
        for k in range(8):
            a, b = o + k, o + (k + 1) % 8
            src += [a, b]
            dst += [b, a]
    edge_index = jnp.array([src, dst], dtype=jnp.int32)              # (2, 32)
    edge_attr_idx = (jnp.arange(edge_index.shape[1]) * 7) % 128      # (32,) token ids
    x_idx = jax.random.randint(kx, (n_nodes,), 0, 128)               # (16,) token ids

    params = init_params(kparams)

    out = gat_forward(params, x_idx, edge_index, edge_attr_idx, ptr)
    out = jax.block_until_ready(out)

    assert out.shape == (len(ptr) - 1, 256), out.shape
    assert bool(jnp.all(jnp.isfinite(out)))
    print("KERNEL_OK")
</pallas_src>

<mosaic_0001>
module attributes {stable_mosaic.version = 11 : i64} {
  func.func @_proj_kernel(%arg0: i32, %arg1: memref<128x64xbf16, #tpu.memory_space<vmem>>, %arg2: memref<64x256xbf16, #tpu.memory_space<vmem>>, %arg3: memref<1x256xf32, #tpu.memory_space<vmem>>, %arg4: memref<128x128xbf16, #tpu.memory_space<vmem>>, %arg5: memref<128x128xbf16, #tpu.memory_space<vmem>>) attributes {dimension_semantics = [#tpu.dimension_semantics<parallel>], iteration_bounds = array<i64: 1>, scalar_prefetch = 0 : i64, scratch_operands = 0 : i64, tpu.core_type = #tpu.core_type<tc>, window_params = [{transform_indices = @transform_0, window_bounds = array<i64: 128, 64>}, {pipeline_mode = #tpu.pipeline_mode<synchronous>, transform_indices = @transform_1, window_bounds = array<i64: 64, 256>}, {pipeline_mode = #tpu.pipeline_mode<synchronous>, transform_indices = @transform_2, window_bounds = array<i64: 1, 256>}, {transform_indices = @transform_3, window_bounds = array<i64: 128, 128>}, {transform_indices = @transform_4, window_bounds = array<i64: 128, 128>}]} {
    %c0 = arith.constant 0 : index
    %c0_0 = arith.constant 0 : index
    %0 = vector.load %arg1[%c0, %c0_0] : memref<128x64xbf16, #tpu.memory_space<vmem>>, vector<128x64xbf16>
    %c0_1 = arith.constant 0 : index
    %c0_2 = arith.constant 0 : index
    %1 = vector.load %arg2[%c0_1, %c0_2] : memref<64x256xbf16, #tpu.memory_space<vmem>>, vector<64x256xbf16>
    %cst = arith.constant dense<0.000000e+00> : vector<128x256xf32>
    %2 = tpu.matmul %0, %1, %cst {dimension_numbers = #tpu.dot_dimension_numbers<[1], [0], [0], [1], [0, 0, 1, 1], [], []>} : vector<128x64xbf16>, vector<64x256xbf16>, vector<128x256xf32> -> vector<128x256xf32>
    %c0_3 = arith.constant 0 : index
    %c0_4 = arith.constant 0 : index
    %3 = vector.load %arg3[%c0_3, %c0_4] : memref<1x256xf32, #tpu.memory_space<vmem>>, vector<1x256xf32>
    %4 = vector.broadcast %3 : vector<1x256xf32> to vector<128x256xf32>
    %5 = arith.addf %2, %4 : vector<128x256xf32>
    %6 = vector.extract_strided_slice %5 {offsets = [0, 0], sizes = [128, 128], strides = [1, 1]} : vector<128x256xf32> to vector<128x128xf32>
    %7 = arith.truncf %6 : vector<128x128xf32> to vector<128x128xbf16>
    %c0_5 = arith.constant 0 : index
    %c0_6 = arith.constant 0 : index
    %8 = vector.load %arg4[%c0_5, %c0_6] : memref<128x128xbf16, #tpu.memory_space<vmem>>, vector<128x128xbf16>
    tpu.vector_store %arg4[%c0_5, %c0_6], %7 {strides = array<i32>} : memref<128x128xbf16, #tpu.memory_space<vmem>>, vector<128x128xbf16>,
    %9 = vector.extract_strided_slice %5 {offsets = [0, 128], sizes = [128, 128], strides = [1, 1]} : vector<128x256xf32> to vector<128x128xf32>
    %10 = arith.truncf %9 : vector<128x128xf32> to vector<128x128xbf16>
    %c0_7 = arith.constant 0 : index
    %c0_8 = arith.constant 0 : index
    %11 = vector.load %arg5[%c0_7, %c0_8] : memref<128x128xbf16, #tpu.memory_space<vmem>>, vector<128x128xbf16>
    tpu.vector_store %arg5[%c0_7, %c0_8], %10 {strides = array<i32>} : memref<128x128xbf16, #tpu.memory_space<vmem>>, vector<128x128xbf16>,
    return
  }
  func.func @transform_0(%arg0: i32) -> (i32, i32) {
    %c0_i32 = arith.constant 0 : i32
    %c0_i32_0 = arith.constant 0 : i32
    return %arg0, %c0_i32 : i32, i32
  }
  func.func @transform_1(%arg0: i32) -> (i32, i32) {
    %c0_i32 = arith.constant 0 : i32
    %c0_i32_0 = arith.constant 0 : i32
    %c0_i32_1 = arith.constant 0 : i32
    return %c0_i32, %c0_i32_0 : i32, i32
  }
  func.func @transform_2(%arg0: i32) -> (i32, i32) {
    %c0_i32 = arith.constant 0 : i32
    %c0_i32_0 = arith.constant 0 : i32
    %c0_i32_1 = arith.constant 0 : i32
    return %c0_i32, %c0_i32_0 : i32, i32
  }
  func.func @transform_3(%arg0: i32) -> (i32, i32) {
    %c0_i32 = arith.constant 0 : i32
    %c0_i32_0 = arith.constant 0 : i32
    return %arg0, %c0_i32 : i32, i32
  }
  func.func @transform_4(%arg0: i32) -> (i32, i32) {
    %c0_i32 = arith.constant 0 : i32
    %c0_i32_0 = arith.constant 0 : i32
    return %arg0, %c0_i32 : i32, i32
  }
}

</mosaic_0001>

<llo_original>
// kernel: tpu_custom_call.1
$region0: #{tpu_custom_call.1}
  #allocation0 [shape = 'u32[]', space=smem, size = 0x4, offset = 0x4, fixed_abs, tag = 'smem constant byte address 0x4 - core index']
  #allocation1 [shape = 'u32[72,128]{1,0:T(1,128)}', space=vmem, size = 0x9000, scoped, tag = 'internal scratch']
  %s0 = inlined_call_operand.vmem [shape: bf16[128,64], index: 0, kind: input, shape index: {}]
  %s1 = inlined_call_operand.vmem [shape: bf16[64,256], index: 1, kind: input, shape index: {}]
  %s2 = inlined_call_operand.vmem [shape: f32[1,256], index: 2, kind: input, shape index: {}]
  %s3 = inlined_call_operand.hbm [shape: bf16[128,128], index: 3, kind: output, shape index: {0}]
  %s4 = inlined_call_operand.hbm [shape: bf16[128,128], index: 4, kind: output, shape index: {1}]
  %5 = xla_tuple %s3, %s4
  %s6 = sld [smem:[#allocation0]]
  $region30: #{tpu_custom_call.1} parent=0
    _
  %s8 = ssub.s32 1, %s6
  %s9 = scalar_select 0, %s8, %s6
  $region1: #{tpu_custom_call.1} parent=0
    #allocation2 [shape = 'u8[32768]{0}', space=vmem, size = 0x8000, scoped, tag = 'output window, operand 0, single buffered']
    #allocation3 [shape = 's32[1]{0}', space=sflag, size = 0x4, scoped, tag = 'scoped memory for tpu_custom_call.1']
    #allocation4 [shape = 'u8[32768]{0}', space=vmem, size = 0x8000, scoped, tag = 'output window, operand 1, single buffered']
    #allocation5 [shape = 's32[1]{0}', space=sflag, size = 0x4, scoped, tag = 'scoped memory for tpu_custom_call.1']
    %10 = vsyncpa [#allocation3], 0
    %11 = vsyncpa [#allocation5], 0
    // Predicated region
    $region2: #{tpu_custom_call.1} parent=1 // pred_check
      _
    $region3: #{tpu_custom_call.1} parent=1 // pred_check_branch
      %13 = sbr.rel (0) target = $region5
    $region4: #{tpu_custom_call.1} parent=1 // pred_region
      _
    $region5: #{tpu_custom_call.1} parent=1 // pred_fallthru
      _
    // Predicated region
    $region6: #{tpu_custom_call.1} parent=1 // pred_check
      _
    $region7: #{tpu_custom_call.1} parent=1 // pred_check_branch
      %15 = sbr.rel (0) target = $region9
    $region8: #{tpu_custom_call.1} parent=1 // pred_region
      _
    $region9: #{tpu_custom_call.1} parent=1 // pred_fallthru
      _
    // Predicated region
    $region10: #{tpu_custom_call.1} parent=1 // pred_check
      _
    $region11: #{tpu_custom_call.1} parent=1 // pred_check_branch
      %17 = sbr.rel (0) target = $region13
    $region12: #{tpu_custom_call.1} parent=1 // pred_region
      _
    $region13: #{tpu_custom_call.1} parent=1 // pred_fallthru
      _
    %v19 = vld [vmem:[%s0] sm:$0xf]
    %v20 = vld [vmem:[%s0 + $0x4] sm:$0xf]
    %v21 = vld [vmem:[%s0 + $0x8] sm:$0xf]
    %v22 = vld [vmem:[%s0 + $0xc] sm:$0xf]
    %v23 = vld [vmem:[%s0 + $0x10] sm:$0xf]
    %v24 = vld [vmem:[%s0 + $0x14] sm:$0xf]
    %v25 = vld [vmem:[%s0 + $0x18] sm:$0xf]
    %v26 = vld [vmem:[%s0 + $0x1c] sm:$0xf]
    %v27 = vld [vmem:[%s0 + $0x20] sm:$0xf]
    %v28 = vld [vmem:[%s0 + $0x24] sm:$0xf]
    %v29 = vld [vmem:[%s0 + $0x28] sm:$0xf]
    %v30 = vld [vmem:[%s0 + $0x2c] sm:$0xf]
    %v31 = vld [vmem:[%s0 + $0x30] sm:$0xf]
    %v32 = vld [vmem:[%s0 + $0x34] sm:$0xf]
    %v33 = vld [vmem:[%s0 + $0x38] sm:$0xf]
    %v34 = vld [vmem:[%s0 + $0x3c] sm:$0xf]
    %v35 = vld [vmem:[%s1] sm:$0xff]
    %v36 = vld [vmem:[%s1 + $0x8] sm:$0xff]
    %v37 = vld [vmem:[%s1 + $0x10] sm:$0xff]
    %v38 = vld [vmem:[%s1 + $0x18] sm:$0xff]
    %v39 = vld [vmem:[%s1 + $0x20] sm:$0xff]
    %v40 = vld [vmem:[%s1 + $0x28] sm:$0xff]
    %v41 = vld [vmem:[%s1 + $0x30] sm:$0xff]
    %v42 = vld [vmem:[%s1 + $0x38] sm:$0xff]
    %v43 = vld [vmem:[%s2] sm:$0x3]
    %v45 = vperm.slane %v43, 0
    %v46 = vperm.slane %v43, 1
    %v65 = vunpack.c.l.b16 %v19
    %v66 = vunpack.c.l.b16 %v20
    %v67 = vunpack.c.l.b16 %v21
    %v68 = vunpack.c.l.b16 %v22
    %v69 = vunpack.c.l.b16 %v23
    %v70 = vunpack.c.l.b16 %v24
    %v71 = vunpack.c.l.b16 %v25
    %v72 = vunpack.c.l.b16 %v26
    %v73 = vunpack.c.l.b16 %v27
    %v74 = vunpack.c.l.b16 %v28
    %v75 = vunpack.c.l.b16 %v29
    %v76 = vunpack.c.l.b16 %v30
    %v77 = vunpack.c.l.b16 %v31
    %v78 = vunpack.c.l.b16 %v32
    %v79 = vunpack.c.l.b16 %v33
    %v80 = vunpack.c.l.b16 %v34
    %v81 = vpack.c.b16 %v66, %v65
    %v82 = vpack.c.b16 %v68, %v67
    %v83 = vpack.c.b16 %v70, %v69
    %v84 = vpack.c.b16 %v72, %v71
    %v85 = vpack.c.b16 %v74, %v73
    %v86 = vpack.c.b16 %v76, %v75
    %v87 = vpack.c.b16 %v78, %v77
    %v88 = vpack.c.b16 %v80, %v79
    %v97 = vunpack.c.l.b16 %v35
    %v98 = vunpack.c.h.b16 %v35
    %v99 = vunpack.c.l.b16 %v36
    %v100 = vunpack.c.h.b16 %v36
    %v101 = vunpack.c.l.b16 %v37
    %v102 = vunpack.c.h.b16 %v37
    %v103 = vunpack.c.l.b16 %v38
    %v104 = vunpack.c.h.b16 %v38
    %v105 = vunpack.c.l.b16 %v39
    %v106 = vunpack.c.h.b16 %v39
    %v107 = vunpack.c.l.b16 %v40
    %v108 = vunpack.c.h.b16 %v40
    %v109 = vunpack.c.l.b16 %v41
    %v110 = vunpack.c.h.b16 %v41
    %v111 = vunpack.c.l.b16 %v42
    %v112 = vunpack.c.h.b16 %v42
    %v113 = vpack.c.b16 %v99, %v97
    %v114 = vpack.c.b16 %v100, %v98
    %v115 = vpack.c.b16 %v103, %v101
    %v116 = vpack.c.b16 %v104, %v102
    %v117 = vpack.c.b16 %v107, %v105
    %v118 = vpack.c.b16 %v108, %v106
    %v119 = vpack.c.b16 %v111, %v109
    %v120 = vpack.c.b16 %v112, %v110
    %vm129 = vcmask 523264
    %v131 = vsel %vm129, %v81, 0
    %v134 = vsel %vm129, %v82, 0
    %v137 = vsel %vm129, %v83, 0
    %v140 = vsel %vm129, %v84, 0
    %v143 = vsel %vm129, %v85, 0
    %v146 = vsel %vm129, %v86, 0
    %v149 = vsel %vm129, %v87, 0
    %v152 = vsel %vm129, %v88, 0
    %154 = vmatpush.bf16.msra.mxu0 0
    %155 = vmatpush.bf16.msra.mxu0 0
    %156 = vmatpush.bf16.msra.mxu0 0
    %157 = vmatpush.bf16.msra.mxu0 0
    %158 = vmatpush.bf16.msra.mxu0 %v119
    %159 = vmatpush.bf16.msra.mxu0 %v117
    %160 = vmatpush.bf16.msra.mxu0 %v115
    %161 = vmatpush.bf16.msra.mxu0 %v113
    %162 = vmatmul.bf16.gmra.mxu0 %v131
    %v163 = vpop.f32.mrf.mxu0
    %v164 = vadd.f32 %v45, %v163
    %v165 = vpop.f32.mrf.mxu0
    %v166 = vadd.f32 %v45, %v165
    %167 = vmatmul.bf16.gmra.mxu0 %v134
    %v168 = vpop.f32.mrf.mxu0
    %v169 = vadd.f32 %v45, %v168
    %v170 = vpop.f32.mrf.mxu0
    %v171 = vadd.f32 %v45, %v170
    %172 = vmatmul.bf16.gmra.mxu0 %v137
    %v173 = vpop.f32.mrf.mxu0
    %v174 = vadd.f32 %v45, %v173
    %v175 = vpop.f32.mrf.mxu0
    %v176 = vadd.f32 %v45, %v175
    %177 = vmatmul.bf16.gmra.mxu0 %v140
    %v178 = vpop.f32.mrf.mxu0
    %v179 = vadd.f32 %v45, %v178
    %v180 = vpop.f32.mrf.mxu0
    %v181 = vadd.f32 %v45, %v180
    %182 = vmatmul.bf16.gmra.mxu0 %v143
    %v183 = vpop.f32.mrf.mxu0
    %v184 = vadd.f32 %v45, %v183
    %v185 = vpop.f32.mrf.mxu0
    %v186 = vadd.f32 %v45, %v185
    %187 = vmatmul.bf16.gmra.mxu0 %v146
    %v188 = vpop.f32.mrf.mxu0
    %v189 = vadd.f32 %v45, %v188
    %v190 = vpop.f32.mrf.mxu0
    %v191 = vadd.f32 %v45, %v190
    %192 = vmatmul.bf16.gmra.mxu0 %v149
    %v193 = vpop.f32.mrf.mxu0
    %v194 = vadd.f32 %v45, %v193
    %v195 = vpop.f32.mrf.mxu0
    %v196 = vadd.f32 %v45, %v195
    %197 = vmatmul.bf16.gmra.mxu0 %v152
    %v198 = vpop.f32.mrf.mxu0
    %v199 = vadd.f32 %v45, %v198
    %v200 = vpop.f32.mrf.mxu0
    %v201 = vadd.f32 %v45, %v200
    %202 = vdwg.mxu0
    %203 = vmatpush.bf16.msra.mxu0 0
    %204 = vmatpush.bf16.msra.mxu0 0
    %205 = vmatpush.bf16.msra.mxu0 0
    %206 = vmatpush.bf16.msra.mxu0 0
    %207 = vmatpush.bf16.msra.mxu0 %v120
    %208 = vmatpush.bf16.msra.mxu0 %v118
    %209 = vmatpush.bf16.msra.mxu0 %v116
    %210 = vmatpush.bf16.msra.mxu0 %v114
    %211 = vmatmul.bf16.gmra.mxu0 %v131
    %v212 = vpop.f32.mrf.mxu0
    %v213 = vadd.f32 %v46, %v212
    %v214 = vpop.f32.mrf.mxu0
    %v215 = vadd.f32 %v46, %v214
    %216 = vmatmul.bf16.gmra.mxu0 %v134
    %v217 = vpop.f32.mrf.mxu0
    %v218 = vadd.f32 %v46, %v217
    %v219 = vpop.f32.mrf.mxu0
    %v220 = vadd.f32 %v46, %v219
    %221 = vmatmul.bf16.gmra.mxu0 %v137
    %v222 = vpop.f32.mrf.mxu0
    %v223 = vadd.f32 %v46, %v222
    %v224 = vpop.f32.mrf.mxu0
    %v225 = vadd.f32 %v46, %v224
    %226 = vmatmul.bf16.gmra.mxu0 %v140
    %v227 = vpop.f32.mrf.mxu0
    %v228 = vadd.f32 %v46, %v227
    %v229 = vpop.f32.mrf.mxu0
    %v230 = vadd.f32 %v46, %v229
    %231 = vmatmul.bf16.gmra.mxu0 %v143
    %v232 = vpop.f32.mrf.mxu0
    %v233 = vadd.f32 %v46, %v232
    %v234 = vpop.f32.mrf.mxu0
    %v235 = vadd.f32 %v46, %v234
    %236 = vmatmul.bf16.gmra.mxu0 %v146
    %v237 = vpop.f32.mrf.mxu0
    %v238 = vadd.f32 %v46, %v237
    %v239 = vpop.f32.mrf.mxu0
    %v240 = vadd.f32 %v46, %v239
    %241 = vmatmul.bf16.gmra.mxu0 %v149
    %v242 = vpop.f32.mrf.mxu0
    %v243 = vadd.f32 %v46, %v242
    %v244 = vpop.f32.mrf.mxu0
    %v245 = vadd.f32 %v46, %v244
    %246 = vmatmul.bf16.gmra.mxu0 %v152
    %v247 = vpop.f32.mrf.mxu0
    %v248 = vadd.f32 %v46, %v247
    %v249 = vpop.f32.mrf.mxu0
    %v250 = vadd.f32 %v46, %v249
    %251 = vdwg.mxu0
    %v252 = vpack.c.bf16 %v164, %v164
    %v253 = vpack.c.bf16 %v166, %v166
    %v254 = vpack.c.bf16 %v169, %v169
    %v255 = vpack.c.bf16 %v171, %v171
    %v256 = vpack.c.bf16 %v174, %v174
    %v257 = vpack.c.bf16 %v176, %v176
    %v258 = vpack.c.bf16 %v179, %v179
    %v259 = vpack.c.bf16 %v181, %v181
    %v260 = vpack.c.bf16 %v184, %v184
    %v261 = vpack.c.bf16 %v186, %v186
    %v262 = vpack.c.bf16 %v189, %v189
    %v263 = vpack.c.bf16 %v191, %v191
    %v264 = vpack.c.bf16 %v194, %v194
    %v265 = vpack.c.bf16 %v196, %v196
    %v266 = vpack.c.bf16 %v199, %v199
    %v267 = vpack.c.bf16 %v201, %v201
    %268 = vst [vmem:[#allocation2] sm:$0xf] %v252
    %269 = vst [vmem:[#allocation2 + $0x4] sm:$0xf] %v253
    %270 = vst [vmem:[#allocation2 + $0x8] sm:$0xf] %v254
    %271 = vst [vmem:[#allocation2 + $0xc] sm:$0xf] %v255
    %272 = vst [vmem:[#allocation2 + $0x10] sm:$0xf] %v256
    %273 = vst [vmem:[#allocation2 + $0x14] sm:$0xf] %v257
    %274 = vst [vmem:[#allocation2 + $0x18] sm:$0xf] %v258
    %275 = vst [vmem:[#allocation2 + $0x1c] sm:$0xf] %v259
    %276 = vst [vmem:[#allocation2 + $0x20] sm:$0xf] %v260
    %277 = vst [vmem:[#allocation2 + $0x24] sm:$0xf] %v261
    %278 = vst [vmem:[#allocation2 + $0x28] sm:$0xf] %v262
    %279 = vst [vmem:[#allocation2 + $0x2c] sm:$0xf] %v263
    %280 = vst [vmem:[#allocation2 + $0x30] sm:$0xf] %v264
    %281 = vst [vmem:[#allocation2 + $0x34] sm:$0xf] %v265
    %282 = vst [vmem:[#allocation2 + $0x38] sm:$0xf] %v266
    %283 = vst [vmem:[#allocation2 + $0x3c] sm:$0xf] %v267
    %v284 = vpack.c.bf16 %v213, %v213
    %v285 = vpack.c.bf16 %v215, %v215
    %v286 = vpack.c.bf16 %v218, %v218
    %v287 = vpack.c.bf16 %v220, %v220
    %v288 = vpack.c.bf16 %v223, %v223
    %v289 = vpack.c.bf16 %v225, %v225
    %v290 = vpack.c.bf16 %v228, %v228
    %v291 = vpack.c.bf16 %v230, %v230
    %v292 = vpack.c.bf16 %v233, %v233
    %v293 = vpack.c.bf16 %v235, %v235
    %v294 = vpack.c.bf16 %v238, %v238
    %v295 = vpack.c.bf16 %v240, %v240
    %v296 = vpack.c.bf16 %v243, %v243
    %v297 = vpack.c.bf16 %v245, %v245
    %v298 = vpack.c.bf16 %v248, %v248
    %v299 = vpack.c.bf16 %v250, %v250
    %300 = vst [vmem:[#allocation4] sm:$0xf] %v284
    %301 = vst [vmem:[#allocation4 + $0x4] sm:$0xf] %v285
    %302 = vst [vmem:[#allocation4 + $0x8] sm:$0xf] %v286
    %303 = vst [vmem:[#allocation4 + $0xc] sm:$0xf] %v287
    %304 = vst [vmem:[#allocation4 + $0x10] sm:$0xf] %v288
    %305 = vst [vmem:[#allocation4 + $0x14] sm:$0xf] %v289
    %306 = vst [vmem:[#allocation4 + $0x18] sm:$0xf] %v290
    %307 = vst [vmem:[#allocation4 + $0x1c] sm:$0xf] %v291
    %308 = vst [vmem:[#allocation4 + $0x20] sm:$0xf] %v292
    %309 = vst [vmem:[#allocation4 + $0x24] sm:$0xf] %v293
    %310 = vst [vmem:[#allocation4 + $0x28] sm:$0xf] %v294
    %311 = vst [vmem:[#allocation4 + $0x2c] sm:$0xf] %v295
    %312 = vst [vmem:[#allocation4 + $0x30] sm:$0xf] %v296
    %313 = vst [vmem:[#allocation4 + $0x34] sm:$0xf] %v297
    %314 = vst [vmem:[#allocation4 + $0x38] sm:$0xf] %v298
    %315 = vst [vmem:[#allocation4 + $0x3c] sm:$0xf] %v299
    // Predicated region
    $region14: #{tpu_custom_call.1} parent=1 // pred_check
      _
    $region15: #{tpu_custom_call.1} parent=1 // pred_check_branch
      %317 = sbr.rel (0) target = $region17
    $region16: #{tpu_custom_call.1} parent=1 // pred_region
      %319 = vsyncadd [#allocation3], 0
      %s320 = sshll.u32 [#allocation2], 4
      %s321 = int_to_ptr.vmem [resolvable:$true] %s320
      %s322 = sshll.u32 %s3, 4
      %s323 = int_to_ptr.hbm [resolvable:$true] %s322
      %328 = dma.vmem_to_hbm [thread:$0]  %s321, 1024, %s323, [#allocation3], 64, 64, 4
    $region17: #{tpu_custom_call.1} parent=1 // pred_fallthru
      _
    // Predicated region
    $region18: #{tpu_custom_call.1} parent=1 // pred_check
      _
    $region19: #{tpu_custom_call.1} parent=1 // pred_check_branch
      %330 = sbr.rel (0) target = $region21
    $region20: #{tpu_custom_call.1} parent=1 // pred_region
      %332 = vsyncadd [#allocation5], 0
      %s333 = sshll.u32 [#allocation4], 4
      %s334 = int_to_ptr.vmem [resolvable:$true] %s333
      %s335 = sshll.u32 %s4, 4
      %s336 = int_to_ptr.hbm [resolvable:$true] %s335
      %341 = dma.vmem_to_hbm [thread:$0]  %s334, 1024, %s336, [#allocation5], 64, 64, 4
    $region21: #{tpu_custom_call.1} parent=1 // pred_fallthru
      _
    // Predicated region
    $region22: #{tpu_custom_call.1} parent=1 // pred_check
      _
    $region23: #{tpu_custom_call.1} parent=1 // pred_check_branch
      %343 = sbr.rel (0) target = $region25
    $region24: #{tpu_custom_call.1} parent=1 // pred_region
      %345 = dma.done [#allocation3], 1024
    $region25: #{tpu_custom_call.1} parent=1 // pred_fallthru
      _
    // Predicated region
    $region26: #{tpu_custom_call.1} parent=1 // pred_check
      _
    $region27: #{tpu_custom_call.1} parent=1 // pred_check_branch
      %347 = sbr.rel (0) target = $region29
    $region28: #{tpu_custom_call.1} parent=1 // pred_region
      %349 = dma.done [#allocation5], 1024
    $region29: #{tpu_custom_call.1} parent=1 // pred_fallthru
      _
    %350 = vsyncpa [#allocation3], 1
    %351 = vsyncpa [#allocation5], 1

</llo_original>
